<compile_context>
chip_gen: v6e
topology: v6e:2x2x1
jax: 0.10.0
libtpu: 0.0.40
codegen_flags: <defaults>
</compile_context>

<pallas_src>
import functools

import jax
import jax.numpy as jnp
from jax.experimental import pallas as pl
from jax.experimental.pallas import tpu as pltpu

LANES = 128
ALIGN = 16  # sublane-tile alignment valid for both f32 (8) and bf16 (16) slabs


def _round_up(n, m):
    return ((n + m - 1) // m) * m


# ----------------------------- parameter init -----------------------------

def _orthogonal(key, out_dim, in_dim, scale=1.0):
    """Deterministic analogue of nn.init.orthogonal_ (QR of a Gaussian)."""
    rows, cols = max(out_dim, in_dim), min(out_dim, in_dim)
    a = jax.random.normal(key, (rows, cols), dtype=jnp.float32)
    q, r = jnp.linalg.qr(a)
    q = q * jnp.sign(jnp.diagonal(r))[None, :]
    if out_dim < in_dim:
        q = q.T
    return (scale * q[:out_dim, :in_dim]).astype(jnp.float32)


def _layer_init_linear(key, in_dim, out_dim):
    """layer_init(): orthogonal weight, zero bias.  Returns W^(in,out), b(1,out)."""
    w = _orthogonal(key, out_dim, in_dim)            # (out, in), PyTorch layout
    b = jnp.zeros((1, out_dim), dtype=jnp.float32)
    return w.T, b                                    # store transposed


def _default_linear(key, in_dim, out_dim):
    """Default PyTorch nn.Linear init (uniform +-1/sqrt(fan_in))."""
    kw, kb = jax.random.split(key)
    bound = 1.0 / (in_dim ** 0.5)
    w = jax.random.uniform(kw, (out_dim, in_dim), minval=-bound, maxval=bound,
                           dtype=jnp.float32)
    b = jax.random.uniform(kb, (1, out_dim), minval=-bound, maxval=bound,
                           dtype=jnp.float32)
    return w.T, b


def init_mlp_dynamics_params(key, state_dim, act_dim,
                             state_hidden_sizes=(64, 64),
                             action_hidden_sizes=(32, 16),
                             head_sizes=(32, 32)):
    keys = jax.random.split(key, 7)
    p = {}
    # state encoder (both layers layer_init'd, ReLU between them)
    p["ws1"], p["bs1"] = _layer_init_linear(keys[0], state_dim, state_hidden_sizes[0])
    p["ws2"], p["bs2"] = _layer_init_linear(keys[1], state_hidden_sizes[0],
                                            state_hidden_sizes[1])
    # action encoder (first layer layer_init'd, second layer default init)
    p["wa1"], p["ba1"] = _layer_init_linear(keys[2], act_dim, action_hidden_sizes[0])
    p["wa2"], p["ba2"] = _default_linear(keys[3], action_hidden_sizes[0],
                                         action_hidden_sizes[1])
    # head (first layer layer_init'd, remaining layers default init)
    cat_dim = state_hidden_sizes[-1] + action_hidden_sizes[-1]
    p["wh1"], p["bh1"] = _layer_init_linear(keys[4], cat_dim, head_sizes[0])
    p["wh2"], p["bh2"] = _default_linear(keys[5], head_sizes[0], head_sizes[1])
    p["wh3"], p["bh3"] = _default_linear(keys[6], head_sizes[1], state_dim)
    return p


# ------------------------ pack params into one slab ------------------------

def pack_mlp_dynamics_params(p, dtype=jnp.bfloat16):
    """Pack all weights into a single (R, 128) slab (dtype = bf16 by default).

    Row layout (every offset is a multiple of 16, so bf16 slices stay on
    (16,128) tile boundaries):
      [0        : s_pad)         W1s : ws1 rows, outputs in lanes [0:64)
      [s_pad    : s_pad+a_pad)   W1a : wa1 rows, outputs in lanes [64:96)
      [o_wf     : o_wf+128)      Wfold = blockdiag(ws2,wa2) @ wh1_pad  (exact fold)
      [o_w4     : o_w4+128)      W4 = wh2 zero-padded
      [o_w5     : o_w5+128)      W5 = wh3 zero-padded
    Biases are returned as a SEPARATE (8,128) f32 array (rows: b1, bfold, b4, b5)
    so bias adds stay exact f32 on the VPU even when the slab is bf16.
    Zero padding is exact: padded lanes carry relu(0+0)=0 and padded weight rows
    are 0, so the fused matmuls reproduce the original network.
    """
    state_dim, s_h1 = p["ws1"].shape
    _, s_h2 = p["ws2"].shape
    act_dim, a_h1 = p["wa1"].shape
    _, a_h2 = p["wa2"].shape
    cat_dim, h1 = p["wh1"].shape
    _, h2 = p["wh2"].shape
    _, out_dim = p["wh3"].shape
    assert cat_dim == s_h2 + a_h2 and out_dim == state_dim
    assert max(s_h1 + a_h1, cat_dim, h1, h2, out_dim) <= LANES

    s_pad = _round_up(state_dim, ALIGN)
    a_pad = _round_up(act_dim, ALIGN)

    def blk(rows):
        return jnp.zeros((rows, LANES), jnp.float32)

    # layer-1 weights; state outputs in lanes [0:s_h1), action in [s_h1:s_h1+a_h1)
    w1s = blk(s_pad).at[:state_dim, :s_h1].set(p["ws1"])
    w1a = blk(a_pad).at[:act_dim, s_h1:s_h1 + a_h1].set(p["wa1"])

    # encoder layer 2 (block diagonal) folded with head layer 1 — exact because
    # the module has NO nonlinearity between `enc` and the first head Linear.
    w2 = blk(LANES)
    w2 = w2.at[:s_h1, :s_h2].set(p["ws2"])
    w2 = w2.at[s_h1:s_h1 + a_h1, s_h2:s_h2 + a_h2].set(p["wa2"])
    b2 = blk(1)
    b2 = b2.at[0, :s_h2].set(p["bs2"][0]).at[0, s_h2:s_h2 + a_h2].set(p["ba2"][0])
    w3 = blk(LANES).at[:cat_dim, :h1].set(p["wh1"])
    wf = w2 @ w3                                   # (128,128)   folded in f32
    bf = (b2 @ w3).at[0, :h1].add(p["bh1"][0])     # (1,128)

    w4 = blk(LANES).at[:h1, :h2].set(p["wh2"])
    w5 = blk(LANES).at[:h2, :out_dim].set(p["wh3"])

    slab = jnp.concatenate([w1s, w1a, wf, w4, w5], axis=0).astype(dtype)

    bias = blk(8)
    bias = bias.at[0, :s_h1].set(p["bs1"][0]).at[0, s_h1:s_h1 + a_h1].set(p["ba1"][0])
    bias = bias.at[1, :].set(bf[0])
    bias = bias.at[2, :h2].set(p["bh2"][0])
    bias = bias.at[3, :out_dim].set(p["bh3"][0])

    return {
        "slab": slab,
        "bias": bias,                       # stays f32 (exact bias adds on VPU)
        "state_dim": int(state_dim),
        "act_dim": int(act_dim),
        "offsets": dict(
            o_wa=int(s_pad),
            o_wf=int(s_pad + a_pad),
            o_w4=int(s_pad + a_pad + LANES),
            o_w5=int(s_pad + a_pad + 2 * LANES),
        ),
    }


# ------------------------------- the kernel -------------------------------

def _mlp_dynamics_kernel(s_ref, a_ref, slab_ref, bias_ref, out_ref, *,
                         state_dim, act_dim, o_wa, o_wf, o_w4, o_w5):
    f32 = jnp.float32

    # Static, 16-aligned row slices of the single packed parameter slab.
    w1s = slab_ref[0:state_dim, :]                   # (state_dim, 128)
    w1a = slab_ref[o_wa:o_wa + act_dim, :]           # (act_dim, 128)
    wf = slab_ref[o_wf:o_wf + LANES, :]
    w4 = slab_ref[o_w4:o_w4 + LANES, :]
    w5 = slab_ref[o_w5:o_w5 + LANES, :]

    b = bias_ref[...]                                # (8,128) f32
    b1, bf, b4, b5 = b[0:1, :], b[1:2, :], b[2:3, :], b[3:4, :]

    wdt = w1s.dtype                                  # f32 or bf16 MXU operands

    def mm(lhs, rhs):
        return jnp.dot(lhs.astype(wdt), rhs, preferred_element_type=f32)

    s = s_ref[...]                                   # (tile, state_dim), f32
    a = a_ref[...]                                   # (tile, act_dim),  f32

    # layer 1: fused state/action encoders (concat absorbed into disjoint lanes)
    h = jnp.maximum(mm(s, w1s) + mm(a, w1a) + b1, 0.0)        # (tile, 128)
    # folded (encoder layer 2  @  head layer 1) + ReLU
    z = jnp.maximum(mm(h, wf) + bf, 0.0)
    # head layer 2 + ReLU, head layer 3 (linear)
    z = jnp.maximum(mm(z, w4) + b4, 0.0)
    y = mm(z, w5) + b5                                        # (tile, 128)

    # Narrow f32 store: only the useful state_dim lanes go back to HBM
    # (HBM side is row-contiguous), no wrapper-side slice pass needed.
    out_ref[...] = y[:, :state_dim].astype(out_ref.dtype)


# --------------------------------- wrapper ---------------------------------

def mlp_dynamics_forward(packed, s, a, *, batch_tile=2048):
    slab, bias = packed["slab"], packed["bias"]
    state_dim, act_dim = packed["state_dim"], packed["act_dim"]

    B = s.shape[0]
    assert s.shape == (B, state_dim) and a.shape == (B, act_dim)
    s = s.astype(jnp.float32)
    a = a.astype(jnp.float32)

    # Tile choice: as large as possible (cap batch_tile) but giving the grid
    # >= 2 steps whenever B allows it, so the "parallel" batch axis can shard
    # across v7x's 2 TensorCores.  Partial boundary blocks handle any B — no
    # concat / pad / slice passes over the batch in the wrapper.
    b8 = _round_up(max(B, 1), 8)
    tile = min(batch_tile, max(8, _round_up(pl.cdiv(b8, 2), 8)))
    grid = pl.cdiv(B, tile)

    kernel = functools.partial(_mlp_dynamics_kernel, state_dim=state_dim,
                               act_dim=act_dim, **packed["offsets"])

    flops = int(2 * grid * tile * LANES * (state_dim + act_dim + 3 * LANES))
    bytes_accessed = int(B * (state_dim + act_dim) * 4
                         + slab.size * slab.dtype.itemsize
                         + bias.size * 4
                         + B * state_dim * 4)

    out = pl.pallas_call(
        kernel,
        out_shape=jax.ShapeDtypeStruct((B, state_dim), jnp.float32),
        grid_spec=pltpu.PrefetchScalarGridSpec(
            num_scalar_prefetch=0,
            grid=(grid,),
            in_specs=[
                pl.BlockSpec((tile, state_dim), lambda i: (i, 0)),  # s tile
                pl.BlockSpec((tile, act_dim), lambda i: (i, 0)),    # a tile
                # constant block index -> DMA'd once, never re-fetched per step
                pl.BlockSpec(slab.shape, lambda i: (0, 0)),         # weight slab
                pl.BlockSpec(bias.shape, lambda i: (0, 0)),         # f32 biases
            ],
            out_specs=pl.BlockSpec((tile, state_dim), lambda i: (i, 0)),
        ),
        compiler_params=pltpu.CompilerParams(
            dimension_semantics=("parallel",)),
        cost_estimate=pl.CostEstimate(flops=flops, transcendentals=0,
                                      bytes_accessed=bytes_accessed),
    )(s, a, slab, bias)

    return out


# ------------------------- pure-JAX reference check -------------------------

def mlp_dynamics_ref(params, s, a):
    h = jnp.maximum(s @ params["ws1"] + params["bs1"], 0.0)
    s_enc = h @ params["ws2"] + params["bs2"]
    ha = jnp.maximum(a @ params["wa1"] + params["ba1"], 0.0)
    a_enc = ha @ params["wa2"] + params["ba2"]
    cat = jnp.concatenate([s_enc, a_enc], axis=1)
    z = jnp.maximum(cat @ params["wh1"] + params["bh1"], 0.0)
    z = jnp.maximum(z @ params["wh2"] + params["bh2"], 0.0)
    return z @ params["wh3"] + params["bh3"]


if __name__ == "__main__":
    state_dim, act_dim, batch = 12, 6, 16

    key = jax.random.PRNGKey(0)
    kp, ks, ka = jax.random.split(key, 3)
    params = init_mlp_dynamics_params(kp, state_dim, act_dim)

    s = jax.random.normal(ks, (batch, state_dim), dtype=jnp.float32)
    a = jax.random.normal(ka, (batch, act_dim), dtype=jnp.float32)
    ref = mlp_dynamics_ref(params, s, a)

    # f32-slab verification path (tight check); small B -> 2 tiny grid steps.
    packed_f32 = pack_mlp_dynamics_params(params, dtype=jnp.float32)
    out = jax.block_until_ready(mlp_dynamics_forward(packed_f32, s, a))
    assert out.shape == (batch, state_dim)
    assert jnp.allclose(out, ref, atol=1e-3, rtol=1e-3)

    # Default bf16-at-the-MXU path: bf16 weight operands, f32 accumulation,
    # f32 bias adds / ReLU on the VPU.  Loose check vs the f32 reference.
    packed_bf16 = pack_mlp_dynamics_params(params)
    out16 = jax.block_until_ready(mlp_dynamics_forward(packed_bf16, s, a))
    assert out16.shape == (batch, state_dim)
    assert float(jnp.max(jnp.abs(out16 - ref))) < 0.1

    # Larger, non-tile-multiple batch exercises the multi-step grid and the
    # partial boundary block (no wrapper-side padding anywhere).
    kb1, kb2 = jax.random.split(jax.random.PRNGKey(1))
    sB = jax.random.normal(kb1, (1000, state_dim), dtype=jnp.float32)
    aB = jax.random.normal(kb2, (1000, act_dim), dtype=jnp.float32)
    outB = jax.block_until_ready(mlp_dynamics_forward(packed_f32, sB, aB))
    refB = mlp_dynamics_ref(params, sB, aB)
    assert outB.shape == (1000, state_dim)
    assert jnp.allclose(outB, refB, atol=1e-3, rtol=1e-3)

    print("KERNEL_OK")
</pallas_src>

<mosaic_0001>
module attributes {stable_mosaic.version = 11 : i64} {
  func.func @_mlp_dynamics_kernel(%arg0: i32, %arg1: memref<8x12xf32, #tpu.memory_space<vmem>>, %arg2: memref<8x6xf32, #tpu.memory_space<vmem>>, %arg3: memref<416x128xf32, #tpu.memory_space<vmem>>, %arg4: memref<8x128xf32, #tpu.memory_space<vmem>>, %arg5: memref<8x12xf32, #tpu.memory_space<vmem>>) attributes {dimension_semantics = [#tpu.dimension_semantics<parallel>], iteration_bounds = array<i64: 2>, scalar_prefetch = 0 : i64, scratch_operands = 0 : i64, tpu.core_type = #tpu.core_type<tc>, window_params = [{transform_indices = @transform_0, window_bounds = array<i64: 8, 12>}, {transform_indices = @transform_1, window_bounds = array<i64: 8, 6>}, {pipeline_mode = #tpu.pipeline_mode<synchronous>, transform_indices = @transform_2, window_bounds = array<i64: 416, 128>}, {pipeline_mode = #tpu.pipeline_mode<synchronous>, transform_indices = @transform_3, window_bounds = array<i64: 8, 128>}, {transform_indices = @transform_4, window_bounds = array<i64: 8, 12>}]} {
    %c0 = arith.constant 0 : index
    %c0_0 = arith.constant 0 : index
    %0 = vector.load %arg3[%c0, %c0_0] : memref<416x128xf32, #tpu.memory_space<vmem>>, vector<12x128xf32>
    %c16 = arith.constant 16 : index
    %c0_1 = arith.constant 0 : index
    %1 = vector.load %arg3[%c16, %c0_1] : memref<416x128xf32, #tpu.memory_space<vmem>>, vector<6x128xf32>
    %c32 = arith.constant 32 : index
    %c0_2 = arith.constant 0 : index
    %2 = vector.load %arg3[%c32, %c0_2] : memref<416x128xf32, #tpu.memory_space<vmem>>, vector<128x128xf32>
    %c160 = arith.constant 160 : index
    %c0_3 = arith.constant 0 : index
    %3 = vector.load %arg3[%c160, %c0_3] : memref<416x128xf32, #tpu.memory_space<vmem>>, vector<128x128xf32>
    %c288 = arith.constant 288 : index
    %c0_4 = arith.constant 0 : index
    %4 = vector.load %arg3[%c288, %c0_4] : memref<416x128xf32, #tpu.memory_space<vmem>>, vector<128x128xf32>
    %c0_5 = arith.constant 0 : index
    %c0_6 = arith.constant 0 : index
    %5 = vector.load %arg4[%c0_5, %c0_6] : memref<8x128xf32, #tpu.memory_space<vmem>>, vector<8x128xf32>
    %6 = vector.extract_strided_slice %5 {offsets = [0, 0], sizes = [1, 128], strides = [1, 1]} : vector<8x128xf32> to vector<1x128xf32>
    %7 = vector.extract_strided_slice %5 {offsets = [1, 0], sizes = [1, 128], strides = [1, 1]} : vector<8x128xf32> to vector<1x128xf32>
    %8 = vector.extract_strided_slice %5 {offsets = [2, 0], sizes = [1, 128], strides = [1, 1]} : vector<8x128xf32> to vector<1x128xf32>
    %9 = vector.extract_strided_slice %5 {offsets = [3, 0], sizes = [1, 128], strides = [1, 1]} : vector<8x128xf32> to vector<1x128xf32>
    %c0_7 = arith.constant 0 : index
    %c0_8 = arith.constant 0 : index
    %10 = vector.load %arg1[%c0_7, %c0_8] : memref<8x12xf32, #tpu.memory_space<vmem>>, vector<8x12xf32>
    %c0_9 = arith.constant 0 : index
    %c0_10 = arith.constant 0 : index
    %11 = vector.load %arg2[%c0_9, %c0_10] : memref<8x6xf32, #tpu.memory_space<vmem>>, vector<8x6xf32>
    %cst = arith.constant dense<0.000000e+00> : vector<8x128xf32>
    %12 = tpu.matmul %10, %0, %cst {dimension_numbers = #tpu.dot_dimension_numbers<[1], [0], [0], [1], [0, 0, 1, 1], [], []>} : vector<8x12xf32>, vector<12x128xf32>, vector<8x128xf32> -> vector<8x128xf32>
    %cst_11 = arith.constant dense<0.000000e+00> : vector<8x128xf32>
    %13 = tpu.matmul %11, %1, %cst_11 {dimension_numbers = #tpu.dot_dimension_numbers<[1], [0], [0], [1], [0, 0, 1, 1], [], []>} : vector<8x6xf32>, vector<6x128xf32>, vector<8x128xf32> -> vector<8x128xf32>
    %14 = arith.addf %12, %13 : vector<8x128xf32>
    %15 = vector.broadcast %6 : vector<1x128xf32> to vector<8x128xf32>
    %16 = arith.addf %14, %15 : vector<8x128xf32>
    %cst_12 = arith.constant 0.000000e+00 : f32
    %17 = vector.broadcast %cst_12 : f32 to vector<8x128xf32>
    %18 = arith.maximumf %16, %17 : vector<8x128xf32>
    %cst_13 = arith.constant dense<0.000000e+00> : vector<8x128xf32>
    %19 = tpu.matmul %18, %2, %cst_13 {dimension_numbers = #tpu.dot_dimension_numbers<[1], [0], [0], [1], [0, 0, 1, 1], [], []>} : vector<8x128xf32>, vector<128x128xf32>, vector<8x128xf32> -> vector<8x128xf32>
    %20 = vector.broadcast %7 : vector<1x128xf32> to vector<8x128xf32>
    %21 = arith.addf %19, %20 : vector<8x128xf32>
    %cst_14 = arith.constant 0.000000e+00 : f32
    %22 = vector.broadcast %cst_14 : f32 to vector<8x128xf32>
    %23 = arith.maximumf %21, %22 : vector<8x128xf32>
    %cst_15 = arith.constant dense<0.000000e+00> : vector<8x128xf32>
    %24 = tpu.matmul %23, %3, %cst_15 {dimension_numbers = #tpu.dot_dimension_numbers<[1], [0], [0], [1], [0, 0, 1, 1], [], []>} : vector<8x128xf32>, vector<128x128xf32>, vector<8x128xf32> -> vector<8x128xf32>
    %25 = vector.broadcast %8 : vector<1x128xf32> to vector<8x128xf32>
    %26 = arith.addf %24, %25 : vector<8x128xf32>
    %cst_16 = arith.constant 0.000000e+00 : f32
    %27 = vector.broadcast %cst_16 : f32 to vector<8x128xf32>
    %28 = arith.maximumf %26, %27 : vector<8x128xf32>
    %cst_17 = arith.constant dense<0.000000e+00> : vector<8x128xf32>
    %29 = tpu.matmul %28, %4, %cst_17 {dimension_numbers = #tpu.dot_dimension_numbers<[1], [0], [0], [1], [0, 0, 1, 1], [], []>} : vector<8x128xf32>, vector<128x128xf32>, vector<8x128xf32> -> vector<8x128xf32>
    %30 = vector.broadcast %9 : vector<1x128xf32> to vector<8x128xf32>
    %31 = arith.addf %29, %30 : vector<8x128xf32>
    %32 = vector.extract_strided_slice %31 {offsets = [0, 0], sizes = [8, 12], strides = [1, 1]} : vector<8x128xf32> to vector<8x12xf32>
    %c0_18 = arith.constant 0 : index
    %c0_19 = arith.constant 0 : index
    %33 = vector.load %arg5[%c0_18, %c0_19] : memref<8x12xf32, #tpu.memory_space<vmem>>, vector<8x12xf32>
    tpu.vector_store %arg5[%c0_18, %c0_19], %32 {strides = array<i32>} : memref<8x12xf32, #tpu.memory_space<vmem>>, vector<8x12xf32>,
    return
  }
  func.func @transform_0(%arg0: i32) -> (i32, i32) {
    %c0_i32 = arith.constant 0 : i32
    %c0_i32_0 = arith.constant 0 : i32
    return %arg0, %c0_i32 : i32, i32
  }
  func.func @transform_1(%arg0: i32) -> (i32, i32) {
    %c0_i32 = arith.constant 0 : i32
    %c0_i32_0 = arith.constant 0 : i32
    return %arg0, %c0_i32 : i32, i32
  }
  func.func @transform_2(%arg0: i32) -> (i32, i32) {
    %c0_i32 = arith.constant 0 : i32
    %c0_i32_0 = arith.constant 0 : i32
    %c0_i32_1 = arith.constant 0 : i32
    return %c0_i32, %c0_i32_0 : i32, i32
  }
  func.func @transform_3(%arg0: i32) -> (i32, i32) {
    %c0_i32 = arith.constant 0 : i32
    %c0_i32_0 = arith.constant 0 : i32
    %c0_i32_1 = arith.constant 0 : i32
    return %c0_i32, %c0_i32_0 : i32, i32
  }
  func.func @transform_4(%arg0: i32) -> (i32, i32) {
    %c0_i32 = arith.constant 0 : i32
    %c0_i32_0 = arith.constant 0 : i32
    return %arg0, %c0_i32 : i32, i32
  }
}

</mosaic_0001>

<llo_original>
// kernel: tpu_custom_call.1
$region0: #{tpu_custom_call.1}
  #allocation0 [shape = 'u32[]', space=smem, size = 0x4, offset = 0x4, fixed_abs, tag = 'smem constant byte address 0x4 - core index']
  #allocation1 [shape = 'u32[144,128]{1,0:T(1,128)}', space=vmem, size = 0x12000, scoped, tag = 'internal scratch']
  %s0 = inlined_call_operand.vmem [shape: f32[16,12], index: 0, kind: input, shape index: {}]
  %s1 = inlined_call_operand.vmem [shape: f32[16,6], index: 1, kind: input, shape index: {}]
  %s2 = inlined_call_operand.hbm [shape: f32[416,128], index: 2, kind: input, shape index: {}]
  %s3 = inlined_call_operand.vmem [shape: f32[8,128], index: 3, kind: input, shape index: {}]
  %s4 = inlined_call_operand.hbm [shape: f32[16,12], index: 4, kind: output, shape index: {}]
  %s5 = sld [smem:[#allocation0]]
  $region53: #{tpu_custom_call.1} parent=0
    _
  %s7 = ssub.s32 1, %s5
  %s8 = scalar_select 0, %s7, %s5
  $region1: #{tpu_custom_call.1} parent=0
    #allocation2 [shape = 'u8[212992]{0}', space=vmem, size = 0x34000, scoped, tag = 'input window, operand 2, single buffered']
    #allocation3 [shape = 's32[2]{0}', space=sflag, size = 0x8, scoped, tag = 'scoped memory for tpu_custom_call.1']
    #allocation4 [shape = 's32[2]{0}', space=sflag, size = 0x8, scoped, tag = 'scoped memory for tpu_custom_call.1']
    #allocation5 [shape = 'u8[8192]{0}', space=vmem, size = 0x2000, scoped, tag = 'output window, operand 0']
    %9 = vsyncpa [#allocation3], 0
    %10 = vsyncpa [#allocation4], 0
    %s11 = scalar_lea.sflag [#allocation4], 1
    %12 = vsyncpa %s11, 0
    loop: start=0, step=1, limit=4
    $region2: #{tpu_custom_call.1} parent=1 // loop_pre_header
      _
    $region3: #{tpu_custom_call.1} parent=1 // loop_header
      %s14 = sphi 0, %s18
      %p15 = scmp.ge.s32.totalorder %s14, 4
      %s24 = sphi 0, %s26
      %s27 = sphi 0, %s24
      %s28 = sphi 0, %s27
      %s44 = sphi 0, %s28
      %s50 = sphi 0, %s52
      %s53 = sphi 0, %s50
      %s54 = sphi 0, %s53
      %s70 = sphi 0, %s54
      %s74 = sphi 0, %s74
      %s76 = sphi 0, %s74
      %s77 = sphi 0, %s76
      %s91 = sphi 0, %s77
      %s95 = sphi 0, %s95
      %s97 = sphi 0, %s95
      %s98 = sphi 0, %s97
      %s112 = sphi 0, %s98
      %s118 = sphi 0, %s120
      %s121 = sphi 0, %s118
      %s122 = sphi 0, %s121
      %s138 = sphi 0, %s122
    $region4: #{tpu_custom_call.1} parent=1 // loop_header_branch
      %17 = sbr.rel (%p15) target = $region8
    $region5: #{tpu_custom_call.1} parent=1 // loop_body
      %s19 = ssub.s32 %s14, 1
      %s20 = ssub.s32 %s14, 2
      %s21 = sadd.s32 %s14, 1
      %s22 = ssub.s32 %s14, %s21
      %p23 = scmp.eq.s32.totalorder %s22, 0
      %s25 = sadd.s32 %s24, 1
      %s26 = scalar_select %p23, %s24, %s25
      %p29 = pneg %p23
      %p30 = scmp.eq.s32.totalorder %s14, 1
      %p31 = por %p29, %p30
      %p32 = scmp.ne.s32.totalorder %s24, %s27
      %p33 = scmp.eq.s32.totalorder %s14, 0
      %p34 = por %p32, %p33
      %p35 = scmp.ne.s32.totalorder %s24, %s27
      %p36 = scmp.eq.s32.totalorder %s19, 1
      %p37 = por %p35, %p36
      %p38 = scmp.ne.s32.totalorder %s27, %s28
      %p39 = scmp.eq.s32.totalorder %s19, 0
      %p40 = por %p38, %p39
      %p41 = scmp.ne.s32.totalorder %s27, %s28
      %p42 = scmp.eq.s32.totalorder %s20, 1
      %p43 = por %p41, %p42
      %p45 = scmp.ne.s32.totalorder %s28, %s44
      %p46 = scmp.eq.s32.totalorder %s20, 0
      %p47 = por %p45, %p46
      %s48 = ssub.s32 %s14, %s21
      %p49 = scmp.eq.s32.totalorder %s48, 0
      %s51 = sadd.s32 %s50, 1
      %s52 = scalar_select %p49, %s50, %s51
      %p55 = pneg %p49
      %p56 = scmp.eq.s32.totalorder %s14, 1
      %p57 = por %p55, %p56
      %p58 = scmp.ne.s32.totalorder %s50, %s53
      %p59 = scmp.eq.s32.totalorder %s14, 0
      %p60 = por %p58, %p59
      %p61 = scmp.ne.s32.totalorder %s50, %s53
      %p62 = scmp.eq.s32.totalorder %s19, 1
      %p63 = por %p61, %p62
      %p64 = scmp.ne.s32.totalorder %s53, %s54
      %p65 = scmp.eq.s32.totalorder %s19, 0
      %p66 = por %p64, %p65
      %p67 = scmp.ne.s32.totalorder %s53, %s54
      %p68 = scmp.eq.s32.totalorder %s20, 1
      %p69 = por %p67, %p68
      %p71 = scmp.ne.s32.totalorder %s54, %s70
      %p72 = scmp.eq.s32.totalorder %s20, 0
      %p73 = por %p71, %p72
      %s75 = sadd.s32 %s74, 1
      %p78 = scmp.eq.s32.totalorder %s14, 1
      %p79 = scmp.ne.s32.totalorder %s74, %s76
      %p80 = scmp.eq.s32.totalorder %s14, 0
      %p81 = por %p79, %p80
      %p82 = scmp.ne.s32.totalorder %s74, %s76
      %p83 = scmp.eq.s32.totalorder %s19, 1
      %p84 = por %p82, %p83
      %p85 = scmp.ne.s32.totalorder %s76, %s77
      %p86 = scmp.eq.s32.totalorder %s19, 0
      %p87 = por %p85, %p86
      %p88 = scmp.ne.s32.totalorder %s76, %s77
      %p89 = scmp.eq.s32.totalorder %s20, 1
      %p90 = por %p88, %p89
      %p92 = scmp.ne.s32.totalorder %s77, %s91
      %p93 = scmp.eq.s32.totalorder %s20, 0
      %p94 = por %p92, %p93
      %s96 = sadd.s32 %s95, 1
      %p99 = scmp.eq.s32.totalorder %s14, 1
      %p100 = scmp.ne.s32.totalorder %s95, %s97
      %p101 = scmp.eq.s32.totalorder %s14, 0
      %p102 = por %p100, %p101
      %p103 = scmp.ne.s32.totalorder %s95, %s97
      %p104 = scmp.eq.s32.totalorder %s19, 1
      %p105 = por %p103, %p104
      %p106 = scmp.ne.s32.totalorder %s97, %s98
      %p107 = scmp.eq.s32.totalorder %s19, 0
      %p108 = por %p106, %p107
      %p109 = scmp.ne.s32.totalorder %s97, %s98
      %p110 = scmp.eq.s32.totalorder %s20, 1
      %p111 = por %p109, %p110
      %p113 = scmp.ne.s32.totalorder %s98, %s112
      %p114 = scmp.eq.s32.totalorder %s20, 0
      %p115 = por %p113, %p114
      %s116 = ssub.s32 %s14, %s21
      %p117 = scmp.eq.s32.totalorder %s116, 0
      %s119 = sadd.s32 %s118, 1
      %s120 = scalar_select %p117, %s118, %s119
      %p123 = pneg %p117
      %p124 = scmp.eq.s32.totalorder %s14, 1
      %p125 = por %p123, %p124
      %p126 = scmp.ne.s32.totalorder %s118, %s121
      %p127 = scmp.eq.s32.totalorder %s14, 0
      %p128 = por %p126, %p127
      %p129 = scmp.ne.s32.totalorder %s118, %s121
      %p130 = scmp.eq.s32.totalorder %s19, 1
      %p131 = por %p129, %p130
      %p132 = scmp.ne.s32.totalorder %s121, %s122
      %p133 = scmp.eq.s32.totalorder %s19, 0
      %p134 = por %p132, %p133
      %p135 = scmp.ne.s32.totalorder %s121, %s122
      %p136 = scmp.eq.s32.totalorder %s20, 1
      %p137 = por %p135, %p136
      %p139 = scmp.ne.s32.totalorder %s122, %s138
      %p140 = scmp.eq.s32.totalorder %s20, 0
      %p141 = por %p139, %p140
      %p142 = scmp.le.s32.totalorder 1, %s14
      %p143 = scmp.lt.s32.totalorder %s14, 3
      %p144 = pnand %p142, %p143
      %p145 = pneg %p144
      // Predicated region
      $region9: #{tpu_custom_call.1} parent=5 // pred_check
        _
      $region10: #{tpu_custom_call.1} parent=5 // pred_check_branch
        %147 = sbr.rel (%p144) target = $region12
      $region11: #{tpu_custom_call.1} parent=5 // pred_region
        %s148 = ssub.s32 %s14, 1
        // Predicated region
        $region13: #{tpu_custom_call.1} parent=11 // pred_check
          %p149 = pneg %p87
        $region14: #{tpu_custom_call.1} parent=11 // pred_check_branch
          %151 = sbr.rel (%p149) target = $region16
        $region15: #{tpu_custom_call.1} parent=11 // pred_region
          %s153 = ssub.s32 6656, 6656
          %154 = vsyncadd [#allocation3], %s153
          %s155 = sshll.u32 [#allocation2], 4
          %s156 = int_to_ptr.vmem [resolvable:$true] %s155
          %161 = dma.hbm_to_vmem [thread:$0]  %s2, 6656, %s156, [#allocation3], 128, 128, 8
        $region16: #{tpu_custom_call.1} parent=11 // pred_fallthru
          _
        // Predicated region
        $region17: #{tpu_custom_call.1} parent=11 // pred_check
          %p162 = pneg %p108
        $region18: #{tpu_custom_call.1} parent=11 // pred_check_branch
          %164 = sbr.rel (%p162) target = $region20
        $region19: #{tpu_custom_call.1} parent=11 // pred_region
          _
        $region20: #{tpu_custom_call.1} parent=11 // pred_fallthru
          _
      $region12: #{tpu_custom_call.1} parent=5 // pred_fallthru
        _
      %p165 = scmp.lt.s32.totalorder %s14, 2
      // Predicated region
      $region21: #{tpu_custom_call.1} parent=5 // pred_check
        %p166 = pneg %p165
      $region22: #{tpu_custom_call.1} parent=5 // pred_check_branch
        %168 = sbr.rel (%p166) target = $region24
      $region23: #{tpu_custom_call.1} parent=5 // pred_region
        // Predicated region
        $region25: #{tpu_custom_call.1} parent=23 // pred_check
          %p169 = pneg %p34
        $region26: #{tpu_custom_call.1} parent=23 // pred_check_branch
          %171 = sbr.rel (%p169) target = $region28
        $region27: #{tpu_custom_call.1} parent=23 // pred_region
          %p172 = scmp.lt.s32.totalorder %s14, 1
          %s173 = scalar_select %p172, %s14, 1
          %s174 = smul.addr %s173, 8
          %s175 = scalar_lea.vmem %s0, %s174
        $region28: #{tpu_custom_call.1} parent=23 // pred_fallthru
          _
        // Predicated region
        $region29: #{tpu_custom_call.1} parent=23 // pred_check
          %p176 = pneg %p60
        $region30: #{tpu_custom_call.1} parent=23 // pred_check_branch
          %178 = sbr.rel (%p176) target = $region32
        $region31: #{tpu_custom_call.1} parent=23 // pred_region
          %p179 = scmp.lt.s32.totalorder %s14, 1
          %s180 = scalar_select %p179, %s14, 1
          %s181 = smul.addr %s180, 8
          %s182 = scalar_lea.vmem %s1, %s181
        $region32: #{tpu_custom_call.1} parent=23 // pred_fallthru
          _
      $region24: #{tpu_custom_call.1} parent=5 // pred_fallthru
        _
      %p183 = scmp.le.s32.totalorder 1, %s14
      %p184 = scmp.lt.s32.totalorder %s14, 3
      %p185 = pnand %p183, %p184
      %p186 = pneg %p185
      // Predicated region
      $region33: #{tpu_custom_call.1} parent=5 // pred_check
        _
      $region34: #{tpu_custom_call.1} parent=5 // pred_check_branch
        %188 = sbr.rel (%p185) target = $region36
      $region35: #{tpu_custom_call.1} parent=5 // pred_region
        %s189 = ssub.s32 %s14, 1
        // Predicated region
        $region37: #{tpu_custom_call.1} parent=35 // pred_check
          %p190 = pneg %p87
        $region38: #{tpu_custom_call.1} parent=35 // pred_check_branch
          %192 = sbr.rel (%p190) target = $region40
        $region39: #{tpu_custom_call.1} parent=35 // pred_region
          %193 = dma.done [#allocation3], 6656
        $region40: #{tpu_custom_call.1} parent=35 // pred_fallthru
          _
        %p194 = scmp.lt.s32.totalorder %s19, 1
        %s195 = scalar_select %p194, %s19, 1
        %s196 = smul.addr %s195, 8
        %s197 = scalar_lea.vmem %s0, %s196
        %p198 = pneg %p40
        %p199 = pneg %p37
        %p200 = scmp.lt.s32.totalorder %s19, 1
        %s201 = scalar_select %p200, %s19, 1
        %s202 = smul.addr %s201, 8
        %s203 = scalar_lea.vmem %s1, %s202
        %p204 = pneg %p66
        %p205 = pneg %p63
        %p206 = pneg %p87
        %p207 = pneg %p84
        %p208 = pneg %p108
        %p209 = pneg %p105
        %p210 = pneg %p134
        %p211 = pneg %p131
        %s212 = sand.u32 %s121, 1
        %s213 = scalar_lea.sflag [#allocation4], %s212
        %s214 = sand.u32 %s121, 1
        %s215 = smul.addr %s214, 8
        %s216 = scalar_lea.vmem [#allocation5], %s215
        %p217 = scmp.lt.s32.totalorder %s19, 1
        %s218 = scalar_select %p217, %s19, 1
        %s219 = smul.addr %s218, 8
        %s220 = scalar_lea.vmem %s0, %s219
        %p221 = scmp.lt.s32.totalorder %s19, 1
        %s222 = scalar_select %p221, %s19, 1
        %s223 = smul.addr %s222, 8
        %s224 = scalar_lea.vmem %s1, %s223
        %v225 = vld [vmem:[#allocation2] sm:$0xff]
        %v226 = vld [vmem:[#allocation2 + $0x8] sm:$0xf]
        %v227 = vld [vmem:[#allocation2 + $0x10] sm:$0x3f]
        %v228 = vld [vmem:[#allocation2 + $0x20] sm:$0xff]
        %v229 = vld [vmem:[#allocation2 + $0x28] sm:$0xff]
        %v230 = vld [vmem:[#allocation2 + $0x30] sm:$0xff]
        %v231 = vld [vmem:[#allocation2 + $0x38] sm:$0xff]
        %v232 = vld [vmem:[#allocation2 + $0x40] sm:$0xff]
        %v233 = vld [vmem:[#allocation2 + $0x48] sm:$0xff]
        %v234 = vld [vmem:[#allocation2 + $0x50] sm:$0xff]
        %v235 = vld [vmem:[#allocation2 + $0x58] sm:$0xff]
        %v236 = vld [vmem:[#allocation2 + $0x60] sm:$0xff]
        %v237 = vld [vmem:[#allocation2 + $0x68] sm:$0xff]
        %v238 = vld [vmem:[#allocation2 + $0x70] sm:$0xff]
        %v239 = vld [vmem:[#allocation2 + $0x78] sm:$0xff]
        %v240 = vld [vmem:[#allocation2 + $0x80] sm:$0xff]
        %v241 = vld [vmem:[#allocation2 + $0x88] sm:$0xff]
        %v242 = vld [vmem:[#allocation2 + $0x90] sm:$0xff]
        %v243 = vld [vmem:[#allocation2 + $0x98] sm:$0xff]
        %v244 = vld [vmem:[#allocation2 + $0xa0] sm:$0xff]
        %v245 = vld [vmem:[#allocation2 + $0xa8] sm:$0xff]
        %v246 = vld [vmem:[#allocation2 + $0xb0] sm:$0xff]
        %v247 = vld [vmem:[#allocation2 + $0xb8] sm:$0xff]
        %v248 = vld [vmem:[#allocation2 + $0xc0] sm:$0xff]
        %v249 = vld [vmem:[#allocation2 + $0xc8] sm:$0xff]
        %v250 = vld [vmem:[#allocation2 + $0xd0] sm:$0xff]
        %v251 = vld [vmem:[#allocation2 + $0xd8] sm:$0xff]
        %v252 = vld [vmem:[#allocation2 + $0xe0] sm:$0xff]
        %v253 = vld [vmem:[#allocation2 + $0xe8] sm:$0xff]
        %v254 = vld [vmem:[#allocation2 + $0xf0] sm:$0xff]
        %v255 = vld [vmem:[#allocation2 + $0xf8] sm:$0xff]
        %v256 = vld [vmem:[#allocation2 + $0x100] sm:$0xff]
        %v257 = vld [vmem:[#allocation2 + $0x108] sm:$0xff]
        %v258 = vld [vmem:[#allocation2 + $0x110] sm:$0xff]
        %v259 = vld [vmem:[#allocation2 + $0x118] sm:$0xff]
        %v260 = vld [vmem:[#allocation2 + $0x120] sm:$0xff]
        %v261 = vld [vmem:[#allocation2 + $0x128] sm:$0xff]
        %v262 = vld [vmem:[#allocation2 + $0x130] sm:$0xff]
        %v263 = vld [vmem:[#allocation2 + $0x138] sm:$0xff]
        %v264 = vld [vmem:[#allocation2 + $0x140] sm:$0xff]
        %v265 = vld [vmem:[#allocation2 + $0x148] sm:$0xff]
        %v266 = vld [vmem:[#allocation2 + $0x150] sm:$0xff]
        %v267 = vld [vmem:[#allocation2 + $0x158] sm:$0xff]
        %v268 = vld [vmem:[#allocation2 + $0x160] sm:$0xff]
        %v269 = vld [vmem:[#allocation2 + $0x168] sm:$0xff]
        %v270 = vld [vmem:[#allocation2 + $0x170] sm:$0xff]
        %v271 = vld [vmem:[#allocation2 + $0x178] sm:$0xff]
        %v272 = vld [vmem:[#allocation2 + $0x180] sm:$0xff]
        %v273 = vld [vmem:[#allocation2 + $0x188] sm:$0xff]
        %v274 = vld [vmem:[#allocation2 + $0x190] sm:$0xff]
        %v275 = vld [vmem:[#allocation2 + $0x198] sm:$0xff]
        %v276 = vld [vmem:[%s3] sm:$0xff]
        %v277 = vld [vmem:[%s220] sm:$0xff]
        %v278 = vld [vmem:[%s224] sm:$0xff]
        %vm279 = vcmask 48128
        %v281 = vsel %vm279, %v278, 0
        %vm283 = vcmask 1045504
        %v285 = vsel %vm283, %v227, 0
        %287 = vmatprep.subr.mxu0 0.0
        %288 = vmatpush1.msra.mxu0 0.0
        %289 = vmatprep.subr.mxu0 0.0
        %290 = vmatpush1.msra.mxu0 0.0
        %291 = vmatprep.subr.mxu0 0.0
        %292 = vmatpush1.msra.mxu0 0.0
        %293 = vmatprep.subr.mxu0 0.0
        %294 = vmatpush1.msra.mxu0 0.0
        %295 = vmatprep.subr.mxu0 0.0
        %296 = vmatpush1.msra.mxu0 0.0
        %297 = vmatprep.subr.mxu0 0.0
        %298 = vmatpush1.msra.mxu0 0.0
        %299 = vmatprep.subr.mxu0 0.0
        %300 = vmatpush1.msra.mxu0 0.0
        %301 = vmatprep.subr.mxu0 0.0
        %302 = vmatpush1.msra.mxu0 0.0
        %303 = vmatprep.subr.mxu0 0.0
        %304 = vmatpush1.msra.mxu0 0.0
        %305 = vmatprep.subr.mxu0 0.0
        %306 = vmatpush1.msra.mxu0 0.0
        %307 = vmatprep.subr.mxu0 0.0
        %308 = vmatpush1.msra.mxu0 0.0
        %309 = vmatprep.subr.mxu0 0.0
        %310 = vmatpush1.msra.mxu0 0.0
        %311 = vmatprep.subr.mxu0 0.0
        %312 = vmatpush1.msra.mxu0 0.0
        %313 = vmatprep.subr.mxu0 0.0
        %314 = vmatpush1.msra.mxu0 0.0
        %315 = vmatprep.subr.mxu0 0.0
        %316 = vmatpush1.msra.mxu0 0.0
        %317 = vmatprep.subr.mxu0 0.0
        %318 = vmatpush1.msra.mxu0 %v285
        %319 = vmatprep.subr.mxu0 0.0
        %320 = vmatpush2.msra.mxu0 0.0
        %321 = vmatprep.subr.mxu0 0.0
        %322 = vmatpush2.msra.mxu0 0.0
        %323 = vmatprep.subr.mxu0 0.0
        %324 = vmatpush2.msra.mxu0 0.0
        %325 = vmatprep.subr.mxu0 0.0
        %326 = vmatpush2.msra.mxu0 0.0
        %327 = vmatprep.subr.mxu0 0.0
        %328 = vmatpush2.msra.mxu0 0.0
        %329 = vmatprep.subr.mxu0 0.0
        %330 = vmatpush2.msra.mxu0 0.0
        %331 = vmatprep.subr.mxu0 0.0
        %332 = vmatpush2.msra.mxu0 0.0
        %333 = vmatprep.subr.mxu0 0.0
        %334 = vmatpush2.msra.mxu0 0.0
        %335 = vmatprep.subr.mxu0 0.0
        %336 = vmatpush2.msra.mxu0 0.0
        %337 = vmatprep.subr.mxu0 0.0
        %338 = vmatpush2.msra.mxu0 0.0
        %339 = vmatprep.subr.mxu0 0.0
        %340 = vmatpush2.msra.mxu0 0.0
        %341 = vmatprep.subr.mxu0 0.0
        %342 = vmatpush2.msra.mxu0 0.0
        %343 = vmatprep.subr.mxu0 0.0
        %344 = vmatpush2.msra.mxu0 0.0
        %345 = vmatprep.subr.mxu0 0.0
        %346 = vmatpush2.msra.mxu0 0.0
        %347 = vmatprep.subr.mxu0 0.0
        %348 = vmatpush2.msra.mxu0 0.0
        %349 = vmatprep.subr.mxu0 0.0
        %350 = vmatpush2.msra.mxu0 0.0
        %351 = vmatprep.mubr.f32.mxu0 0.0
        %352 = vmatmul.mubr.f32.gmra.mxu0 %v281
        %v353 = vpop.f32.mrf.mxu0
        %v354 = vadd.f32 0.0, %v353
        %v355 = vpop.f32.mrf.mxu0
        %356 = vdwg.mxu0
        %vm357 = vcmask 97280
        %v359 = vsel %vm357, %v277, 0
        %vm361 = vcmask 1043456
        %v363 = vsel %vm361, %v226, 0
        %365 = vmatprep.subr.mxu0 0.0
        %366 = vmatpush1.msra.mxu0 0.0
        %367 = vmatprep.subr.mxu0 0.0
        %368 = vmatpush1.msra.mxu0 0.0
        %369 = vmatprep.subr.mxu0 0.0
        %370 = vmatpush1.msra.mxu0 0.0
        %371 = vmatprep.subr.mxu0 0.0
        %372 = vmatpush1.msra.mxu0 0.0
        %373 = vmatprep.subr.mxu0 0.0
        %374 = vmatpush1.msra.mxu0 0.0
        %375 = vmatprep.subr.mxu0 0.0
        %376 = vmatpush1.msra.mxu0 0.0
        %377 = vmatprep.subr.mxu0 0.0
        %378 = vmatpush1.msra.mxu0 0.0
        %379 = vmatprep.subr.mxu0 0.0
        %380 = vmatpush1.msra.mxu0 0.0
        %381 = vmatprep.subr.mxu0 0.0
        %382 = vmatpush1.msra.mxu0 0.0
        %383 = vmatprep.subr.mxu0 0.0
        %384 = vmatpush1.msra.mxu0 0.0
        %385 = vmatprep.subr.mxu0 0.0
        %386 = vmatpush1.msra.mxu0 0.0
        %387 = vmatprep.subr.mxu0 0.0
        %388 = vmatpush1.msra.mxu0 0.0
        %389 = vmatprep.subr.mxu0 0.0
        %390 = vmatpush1.msra.mxu0 0.0
        %391 = vmatprep.subr.mxu0 0.0
        %392 = vmatpush1.msra.mxu0 0.0
        %393 = vmatprep.subr.mxu0 0.0
        %394 = vmatpush1.msra.mxu0 %v363
        %395 = vmatprep.subr.mxu0 0.0
        %396 = vmatpush1.msra.mxu0 %v225
        %397 = vmatprep.subr.mxu0 0.0
        %398 = vmatpush2.msra.mxu0 0.0
        %399 = vmatprep.subr.mxu0 0.0
        %400 = vmatpush2.msra.mxu0 0.0
        %401 = vmatprep.subr.mxu0 0.0
        %402 = vmatpush2.msra.mxu0 0.0
        %403 = vmatprep.subr.mxu0 0.0
        %404 = vmatpush2.msra.mxu0 0.0
        %405 = vmatprep.subr.mxu0 0.0
        %406 = vmatpush2.msra.mxu0 0.0
        %407 = vmatprep.subr.mxu0 0.0
        %408 = vmatpush2.msra.mxu0 0.0
        %409 = vmatprep.subr.mxu0 0.0
        %410 = vmatpush2.msra.mxu0 0.0
        %411 = vmatprep.subr.mxu0 0.0
        %412 = vmatpush2.msra.mxu0 0.0
        %413 = vmatprep.subr.mxu0 0.0
        %414 = vmatpush2.msra.mxu0 0.0
        %415 = vmatprep.subr.mxu0 0.0
        %416 = vmatpush2.msra.mxu0 0.0
        %417 = vmatprep.subr.mxu0 0.0
        %418 = vmatpush2.msra.mxu0 0.0
        %419 = vmatprep.subr.mxu0 0.0
        %420 = vmatpush2.msra.mxu0 0.0
        %421 = vmatprep.subr.mxu0 0.0
        %422 = vmatpush2.msra.mxu0 0.0
        %423 = vmatprep.subr.mxu0 0.0
        %424 = vmatpush2.msra.mxu0 0.0
        %425 = vmatprep.subr.mxu0 0.0
        %426 = vmatpush2.msra.mxu0 0.0
        %427 = vmatprep.subr.mxu0 0.0
        %428 = vmatpush2.msra.mxu0 0.0
        %429 = vmatprep.mubr.f32.mxu0 0.0
        %430 = vmatmul.mubr.f32.gmra.mxu0 %v359
        %v431 = vpop.f32.mrf.mxu0
        %v432 = vadd.f32 %v354, %v431
        %v433 = vpop.f32.mrf.mxu0
        %434 = vdwg.mxu0
        %v435 = vlaneseq
        %v436 = vshrl.u32 %v435, 7
        %v437 = vsub.s32 0, %v436
        %v438 = vrot.slane %v276, %v437
        %v439 = vadd.f32 %v432, %v438
        %v440 = vmax.f32 %v439, 0.0
        %v441 = vlaneseq
        %v442 = vshrl.u32 %v441, 7
        %v443 = vsub.s32 1, %v442
        %v444 = vrot.slane %v276, %v443
        %445 = vmatprep.subr.mxu0 0.0
        %446 = vmatpush1.msra.mxu0 %v243
        %447 = vmatprep.subr.mxu0 0.0
        %448 = vmatpush1.msra.mxu0 %v242
        %449 = vmatprep.subr.mxu0 0.0
        %450 = vmatpush1.msra.mxu0 %v241
        %451 = vmatprep.subr.mxu0 0.0
        %452 = vmatpush1.msra.mxu0 %v240
        %453 = vmatprep.subr.mxu0 0.0
        %454 = vmatpush1.msra.mxu0 %v239
        %455 = vmatprep.subr.mxu0 0.0
        %456 = vmatpush1.msra.mxu0 %v238
        %457 = vmatprep.subr.mxu0 0.0
        %458 = vmatpush1.msra.mxu0 %v237
        %459 = vmatprep.subr.mxu0 0.0
        %460 = vmatpush1.msra.mxu0 %v236
        %461 = vmatprep.subr.mxu0 0.0
        %462 = vmatpush1.msra.mxu0 %v235
        %463 = vmatprep.subr.mxu0 0.0
        %464 = vmatpush1.msra.mxu0 %v234
        %465 = vmatprep.subr.mxu0 0.0
        %466 = vmatpush1.msra.mxu0 %v233
        %467 = vmatprep.subr.mxu0 0.0
        %468 = vmatpush1.msra.mxu0 %v232
        %469 = vmatprep.subr.mxu0 0.0
        %470 = vmatpush1.msra.mxu0 %v231
        %471 = vmatprep.subr.mxu0 0.0
        %472 = vmatpush1.msra.mxu0 %v230
        %473 = vmatprep.subr.mxu0 0.0
        %474 = vmatpush1.msra.mxu0 %v229
        %475 = vmatprep.subr.mxu0 0.0
        %476 = vmatpush1.msra.mxu0 %v228
        %477 = vmatprep.subr.mxu0 0.0
        %478 = vmatpush2.msra.mxu0 0.0
        %479 = vmatprep.subr.mxu0 0.0
        %480 = vmatpush2.msra.mxu0 0.0
        %481 = vmatprep.subr.mxu0 0.0
        %482 = vmatpush2.msra.mxu0 0.0
        %483 = vmatprep.subr.mxu0 0.0
        %484 = vmatpush2.msra.mxu0 0.0
        %485 = vmatprep.subr.mxu0 0.0
        %486 = vmatpush2.msra.mxu0 0.0
        %487 = vmatprep.subr.mxu0 0.0
        %488 = vmatpush2.msra.mxu0 0.0
        %489 = vmatprep.subr.mxu0 0.0
        %490 = vmatpush2.msra.mxu0 0.0
        %491 = vmatprep.subr.mxu0 0.0
        %492 = vmatpush2.msra.mxu0 0.0
        %493 = vmatprep.subr.mxu0 0.0
        %494 = vmatpush2.msra.mxu0 0.0
        %495 = vmatprep.subr.mxu0 0.0
        %496 = vmatpush2.msra.mxu0 0.0
        %497 = vmatprep.subr.mxu0 0.0
        %498 = vmatpush2.msra.mxu0 0.0
        %499 = vmatprep.subr.mxu0 0.0
        %500 = vmatpush2.msra.mxu0 0.0
        %501 = vmatprep.subr.mxu0 0.0
        %502 = vmatpush2.msra.mxu0 0.0
        %503 = vmatprep.subr.mxu0 0.0
        %504 = vmatpush2.msra.mxu0 0.0
        %505 = vmatprep.subr.mxu0 0.0
        %506 = vmatpush2.msra.mxu0 0.0
        %507 = vmatprep.subr.mxu0 0.0
        %508 = vmatpush2.msra.mxu0 0.0
        %509 = vmatprep.mubr.f32.mxu0 0.0
        %510 = vmatmul.mubr.f32.gmra.mxu0 %v440
        %v511 = vpop.f32.mrf.mxu0
        %v512 = vadd.f32 %v444, %v511
        %v513 = vpop.f32.mrf.mxu0
        %514 = vdwg.mxu0
        %v515 = vmax.f32 %v512, 0.0
        %v516 = vlaneseq
        %v517 = vshrl.u32 %v516, 7
        %v518 = vsub.s32 2, %v517
        %v519 = vrot.slane %v276, %v518
        %520 = vmatprep.subr.mxu0 0.0
        %521 = vmatpush1.msra.mxu0 %v259
        %522 = vmatprep.subr.mxu0 0.0
        %523 = vmatpush1.msra.mxu0 %v258
        %524 = vmatprep.subr.mxu0 0.0
        %525 = vmatpush1.msra.mxu0 %v257
        %526 = vmatprep.subr.mxu0 0.0
        %527 = vmatpush1.msra.mxu0 %v256
        %528 = vmatprep.subr.mxu0 0.0
        %529 = vmatpush1.msra.mxu0 %v255
        %530 = vmatprep.subr.mxu0 0.0
        %531 = vmatpush1.msra.mxu0 %v254
        %532 = vmatprep.subr.mxu0 0.0
        %533 = vmatpush1.msra.mxu0 %v253
        %534 = vmatprep.subr.mxu0 0.0
        %535 = vmatpush1.msra.mxu0 %v252
        %536 = vmatprep.subr.mxu0 0.0
        %537 = vmatpush1.msra.mxu0 %v251
        %538 = vmatprep.subr.mxu0 0.0
        %539 = vmatpush1.msra.mxu0 %v250
        %540 = vmatprep.subr.mxu0 0.0
        %541 = vmatpush1.msra.mxu0 %v249
        %542 = vmatprep.subr.mxu0 0.0
        %543 = vmatpush1.msra.mxu0 %v248
        %544 = vmatprep.subr.mxu0 0.0
        %545 = vmatpush1.msra.mxu0 %v247
        %546 = vmatprep.subr.mxu0 0.0
        %547 = vmatpush1.msra.mxu0 %v246
        %548 = vmatprep.subr.mxu0 0.0
        %549 = vmatpush1.msra.mxu0 %v245
        %550 = vmatprep.subr.mxu0 0.0
        %551 = vmatpush1.msra.mxu0 %v244
        %552 = vmatprep.subr.mxu0 0.0
        %553 = vmatpush2.msra.mxu0 0.0
        %554 = vmatprep.subr.mxu0 0.0
        %555 = vmatpush2.msra.mxu0 0.0
        %556 = vmatprep.subr.mxu0 0.0
        %557 = vmatpush2.msra.mxu0 0.0
        %558 = vmatprep.subr.mxu0 0.0
        %559 = vmatpush2.msra.mxu0 0.0
        %560 = vmatprep.subr.mxu0 0.0
        %561 = vmatpush2.msra.mxu0 0.0
        %562 = vmatprep.subr.mxu0 0.0
        %563 = vmatpush2.msra.mxu0 0.0
        %564 = vmatprep.subr.mxu0 0.0
        %565 = vmatpush2.msra.mxu0 0.0
        %566 = vmatprep.subr.mxu0 0.0
        %567 = vmatpush2.msra.mxu0 0.0
        %568 = vmatprep.subr.mxu0 0.0
        %569 = vmatpush2.msra.mxu0 0.0
        %570 = vmatprep.subr.mxu0 0.0
        %571 = vmatpush2.msra.mxu0 0.0
        %572 = vmatprep.subr.mxu0 0.0
        %573 = vmatpush2.msra.mxu0 0.0
        %574 = vmatprep.subr.mxu0 0.0
        %575 = vmatpush2.msra.mxu0 0.0
        %576 = vmatprep.subr.mxu0 0.0
        %577 = vmatpush2.msra.mxu0 0.0
        %578 = vmatprep.subr.mxu0 0.0
        %579 = vmatpush2.msra.mxu0 0.0
        %580 = vmatprep.subr.mxu0 0.0
        %581 = vmatpush2.msra.mxu0 0.0
        %582 = vmatprep.subr.mxu0 0.0
        %583 = vmatpush2.msra.mxu0 0.0
        %584 = vmatprep.mubr.f32.mxu0 0.0
        %585 = vmatmul.mubr.f32.gmra.mxu0 %v515
        %v586 = vpop.f32.mrf.mxu0
        %v587 = vadd.f32 %v519, %v586
        %v588 = vpop.f32.mrf.mxu0
        %589 = vdwg.mxu0
        %v590 = vmax.f32 %v587, 0.0
        %v591 = vlaneseq
        %v592 = vshrl.u32 %v591, 7
        %v593 = vsub.s32 3, %v592
        %v594 = vrot.slane %v276, %v593
        %595 = vmatprep.subr.mxu0 0.0
        %596 = vmatpush1.msra.mxu0 %v275
        %597 = vmatprep.subr.mxu0 0.0
        %598 = vmatpush1.msra.mxu0 %v274
        %599 = vmatprep.subr.mxu0 0.0
        %600 = vmatpush1.msra.mxu0 %v273
        %601 = vmatprep.subr.mxu0 0.0
        %602 = vmatpush1.msra.mxu0 %v272
        %603 = vmatprep.subr.mxu0 0.0
        %604 = vmatpush1.msra.mxu0 %v271
        %605 = vmatprep.subr.mxu0 0.0
        %606 = vmatpush1.msra.mxu0 %v270
        %607 = vmatprep.subr.mxu0 0.0
        %608 = vmatpush1.msra.mxu0 %v269
        %609 = vmatprep.subr.mxu0 0.0
        %610 = vmatpush1.msra.mxu0 %v268
        %611 = vmatprep.subr.mxu0 0.0
        %612 = vmatpush1.msra.mxu0 %v267
        %613 = vmatprep.subr.mxu0 0.0
        %614 = vmatpush1.msra.mxu0 %v266
        %615 = vmatprep.subr.mxu0 0.0
        %616 = vmatpush1.msra.mxu0 %v265
        %617 = vmatprep.subr.mxu0 0.0
        %618 = vmatpush1.msra.mxu0 %v264
        %619 = vmatprep.subr.mxu0 0.0
        %620 = vmatpush1.msra.mxu0 %v263
        %621 = vmatprep.subr.mxu0 0.0
        %622 = vmatpush1.msra.mxu0 %v262
        %623 = vmatprep.subr.mxu0 0.0
        %624 = vmatpush1.msra.mxu0 %v261
        %625 = vmatprep.subr.mxu0 0.0
        %626 = vmatpush1.msra.mxu0 %v260
        %627 = vmatprep.subr.mxu0 0.0
        %628 = vmatpush2.msra.mxu0 0.0
        %629 = vmatprep.subr.mxu0 0.0
        %630 = vmatpush2.msra.mxu0 0.0
        %631 = vmatprep.subr.mxu0 0.0
        %632 = vmatpush2.msra.mxu0 0.0
        %633 = vmatprep.subr.mxu0 0.0
        %634 = vmatpush2.msra.mxu0 0.0
        %635 = vmatprep.subr.mxu0 0.0
        %636 = vmatpush2.msra.mxu0 0.0
        %637 = vmatprep.subr.mxu0 0.0
        %638 = vmatpush2.msra.mxu0 0.0
        %639 = vmatprep.subr.mxu0 0.0
        %640 = vmatpush2.msra.mxu0 0.0
        %641 = vmatprep.subr.mxu0 0.0
        %642 = vmatpush2.msra.mxu0 0.0
        %643 = vmatprep.subr.mxu0 0.0
        %644 = vmatpush2.msra.mxu0 0.0
        %645 = vmatprep.subr.mxu0 0.0
        %646 = vmatpush2.msra.mxu0 0.0
        %647 = vmatprep.subr.mxu0 0.0
        %648 = vmatpush2.msra.mxu0 0.0
        %649 = vmatprep.subr.mxu0 0.0
        %650 = vmatpush2.msra.mxu0 0.0
        %651 = vmatprep.subr.mxu0 0.0
        %652 = vmatpush2.msra.mxu0 0.0
        %653 = vmatprep.subr.mxu0 0.0
        %654 = vmatpush2.msra.mxu0 0.0
        %655 = vmatprep.subr.mxu0 0.0
        %656 = vmatpush2.msra.mxu0 0.0
        %657 = vmatprep.subr.mxu0 0.0
        %658 = vmatpush2.msra.mxu0 0.0
        %659 = vmatprep.mubr.f32.mxu0 0.0
        %660 = vmatmul.mubr.f32.gmra.mxu0 %v590
        %v661 = vpop.f32.mrf.mxu0
        %v662 = vadd.f32 %v594, %v661
        %v663 = vpop.f32.mrf.mxu0
        %664 = vdwg.mxu0
        %665 = vst.msk [vmem:[%s216] sm:$0xff] %vm357, %v662
        %s666 = sand.u32 %s121, 1
        %s667 = scalar_lea.sflag [#allocation4], %s666
        %s668 = sand.u32 %s121, 1
        %s669 = smul.addr %s668, 8
        %s670 = scalar_lea.vmem [#allocation5], %s669
        // Predicated region
        $region41: #{tpu_custom_call.1} parent=35 // pred_check
          %p671 = pneg %p131
        $region42: #{tpu_custom_call.1} parent=35 // pred_check_branch
          %673 = sbr.rel (%p671) target = $region44
        $region43: #{tpu_custom_call.1} parent=35 // pred_region
          %s675 = ssub.s32 128, 128
          %676 = vsyncadd %s667, %s675
          %s677 = smul.addr %s19, 128
          %s678 = scalar_lea.hbm %s4, %s677
          %s680 = sshll.u32 %s670, 4
          %s681 = int_to_ptr.vmem [resolvable:$true] %s680
          %683 = dma.vmem_to_hbm [thread:$0]  %s681, 128, %s678, %s667
        $region44: #{tpu_custom_call.1} parent=35 // pred_fallthru
          _
      $region36: #{tpu_custom_call.1} parent=5 // pred_fallthru
        _
      %p684 = scmp.le.s32.totalorder 2, %s14
      // Predicated region
      $region45: #{tpu_custom_call.1} parent=5 // pred_check
        %p685 = pneg %p684
      $region46: #{tpu_custom_call.1} parent=5 // pred_check_branch
        %687 = sbr.rel (%p685) target = $region48
      $region47: #{tpu_custom_call.1} parent=5 // pred_region
        %s688 = ssub.s32 %s14, 2
        // Predicated region
        $region49: #{tpu_custom_call.1} parent=47 // pred_check
          %p689 = pneg %p137
        $region50: #{tpu_custom_call.1} parent=47 // pred_check_branch
          %691 = sbr.rel (%p689) target = $region52
        $region51: #{tpu_custom_call.1} parent=47 // pred_region
          %s692 = sand.u32 %s122, 1
          %s693 = scalar_lea.sflag [#allocation4], %s692
          %s694 = sand.u32 %s122, 1
          %s695 = smul.addr %s694, 8
          %s696 = scalar_lea.vmem [#allocation5], %s695
          %697 = dma.done %s693, 128
        $region52: #{tpu_custom_call.1} parent=47 // pred_fallthru
          _
      $region48: #{tpu_custom_call.1} parent=5 // pred_fallthru
        _
    $region6: #{tpu_custom_call.1} parent=1 // loop_footer
      %s18 = sadd.s32 1, %s14
    $region7: #{tpu_custom_call.1} parent=1 // loop_footer_branch
      %13 = sbr.rel target = $region3
    $region8: #{tpu_custom_call.1} parent=1 // loop_exit
      _
    %698 = vsyncpa [#allocation3], 1
    %s699 = scalar_lea.sflag [#allocation3], 1
    %700 = vsyncpa %s699, 1
    %701 = vsyncpa [#allocation4], 1
    %s702 = scalar_lea.sflag [#allocation4], 1
    %703 = vsyncpa %s702, 1

</llo_original>
